<compile_context>
chip_gen: v5e
topology: v5e:2x2
jax: 0.10.0
libtpu: 0.0.40
codegen_flags: <defaults>
</compile_context>

<pallas_src>
import functools

import jax
import jax.numpy as jnp
from jax import lax
from jax.experimental import pallas as pl
from jax.experimental.pallas import tpu as pltpu

_INV_SQRT2 = 0.7071067811865476


def _gelu_exact(y_f32):
    # exact (erf-based) GELU, matching torch.nn.GELU() default
    return 0.5 * y_f32 * (1.0 + lax.erf(y_f32 * jnp.float32(_INV_SQRT2)))


def _proj_gelu_kernel(x_ref, w_ref, b_ref, o_ref, acc_ref, *, e_total, tk, mask_k_tail):
    """General 3-D grid (M, N, K) fused GEMM + bias + GELU with f32 VMEM accumulator."""
    k = pl.program_id(2)

    @pl.when(k == 0)
    def _():
        # Start the accumulator at the broadcast bias (avoids a separate epilogue add).
        acc_ref[...] = jnp.broadcast_to(b_ref[...].astype(jnp.float32), acc_ref.shape)

    x = x_ref[...]
    w = w_ref[...]
    if mask_k_tail:
        # E does not divide tk: zero BOTH the x tail columns and the w tail rows so the
        # out-of-bounds garbage (possibly NaN/Inf bit patterns) contributes exactly 0.
        gk_x = k * tk + lax.broadcasted_iota(jnp.int32, x.shape, 1)
        x = jnp.where(gk_x < e_total, x, jnp.zeros_like(x))
        gk_w = k * tk + lax.broadcasted_iota(jnp.int32, w.shape, 0)
        w = jnp.where(gk_w < e_total, w, jnp.zeros_like(w))

    acc_ref[...] += jnp.dot(x, w, preferred_element_type=jnp.float32)

    @pl.when(k == pl.num_programs(2) - 1)
    def _():
        o_ref[...] = _gelu_exact(acc_ref[...]).astype(o_ref.dtype)


def _proj_gelu_resident_kernel(x_ref, w_ref, b_ref, o_ref):
    """Weight-resident path: full (E, N) weight pinned in VMEM, 1-D grid over M."""
    acc = jnp.dot(x_ref[...], w_ref[...], preferred_element_type=jnp.float32)
    acc = acc + b_ref[...].astype(jnp.float32)
    o_ref[...] = _gelu_exact(acc).astype(o_ref.dtype)


def projection_block(x, weight, bias, *, tm=512, tn=512, tk=1024,
                     compute_dtype=jnp.bfloat16, out_dtype=None,
                     weight_resident_bytes=8 * 1024 * 1024):
    """x: (..., E); weight: (E, N) (== torch Linear.weight.T); bias: (N,). Returns (..., N)."""
    *lead, E = x.shape
    N = weight.shape[1]
    out_dtype = x.dtype if out_dtype is None else out_dtype

    x2d = x.reshape(-1, E)
    M = x2d.shape[0]

    # bf16 operands on the MXU (f32 accumulation stays inside the kernel).
    if compute_dtype is not None:
        x2d = x2d.astype(compute_dtype)
        weight = weight.astype(compute_dtype)
    cbytes = jnp.dtype(x2d.dtype).itemsize
    obytes = jnp.dtype(out_dtype).itemsize
    b2d = bias.reshape(1, N)
    bbytes = jnp.dtype(b2d.dtype).itemsize

    # Tile clamping: full-extent blocks are always legal; otherwise the (8,128)/MXU-aligned
    # defaults apply.
    tm_eff = M if M <= tm else tm
    tn_eff = N if N <= tn else tn
    tk_eff = E if E <= tk else tk

    m_tiles = pl.cdiv(M, tm_eff)
    n_tiles = pl.cdiv(N, tn_eff)
    k_tiles = pl.cdiv(E, tk_eff)

    # ---- Weight-resident fast path: weight/bias DMA'd exactly once, grid only over M ----
    resident_vmem = (2 * tm_eff * E * cbytes      # double-buffered x tile
                     + 2 * E * N * cbytes         # weight (budget 2 buffers to be safe)
                     + 2 * N * bbytes
                     + 2 * tm_eff * N * obytes    # double-buffered output tile
                     + tm_eff * N * 4)            # f32 accumulate headroom
    use_resident = (E * N * cbytes <= weight_resident_bytes
                    and resident_vmem <= 32 * 1024 * 1024)

    if use_resident:
        cost = pl.CostEstimate(
            flops=2 * M * N * E, transcendentals=M * N,
            bytes_accessed=M * E * cbytes + E * N * cbytes + N * bbytes + M * N * obytes)
        out = pl.pallas_call(
            _proj_gelu_resident_kernel,
            out_shape=jax.ShapeDtypeStruct((M, N), out_dtype),
            grid_spec=pltpu.PrefetchScalarGridSpec(
                num_scalar_prefetch=0,
                grid=(m_tiles,),
                in_specs=[
                    pl.BlockSpec((tm_eff, E), lambda i: (i, 0)),
                    pl.BlockSpec((E, N), lambda i: (0, 0)),
                    pl.BlockSpec((1, N), lambda i: (0, 0)),
                ],
                out_specs=pl.BlockSpec((tm_eff, N), lambda i: (i, 0)),
            ),
            compiler_params=pltpu.CompilerParams(
                dimension_semantics=("parallel",),
                vmem_limit_bytes=48 * 1024 * 1024,
            ),
            cost_estimate=cost,
        )(x2d, weight, b2d)
        return out.reshape(*lead, N)

    # ---- General tiled path: 3-D grid, K (embed_dim) as the last "arbitrary" axis ----
    mask_k_tail = (E % tk_eff) != 0
    kernel = functools.partial(_proj_gelu_kernel, e_total=E, tk=tk_eff,
                               mask_k_tail=mask_k_tail)

    cost = pl.CostEstimate(
        flops=2 * M * N * E, transcendentals=M * N,
        bytes_accessed=(M * E * cbytes * n_tiles       # x re-read once per N tile
                        + E * N * cbytes * m_tiles     # weight re-read once per M tile
                        + N * bbytes * m_tiles
                        + M * N * obytes))

    out = pl.pallas_call(
        kernel,
        out_shape=jax.ShapeDtypeStruct((M, N), out_dtype),
        grid_spec=pltpu.PrefetchScalarGridSpec(
            num_scalar_prefetch=0,
            grid=(m_tiles, n_tiles, k_tiles),
            in_specs=[
                pl.BlockSpec((tm_eff, tk_eff), lambda i, j, k: (i, k)),
                pl.BlockSpec((tk_eff, tn_eff), lambda i, j, k: (k, j)),
                pl.BlockSpec((1, tn_eff), lambda i, j, k: (0, j)),
            ],
            out_specs=pl.BlockSpec((tm_eff, tn_eff), lambda i, j, k: (i, j)),
            scratch_shapes=[pltpu.VMEM((tm_eff, tn_eff), jnp.float32)],
        ),
        compiler_params=pltpu.CompilerParams(
            dimension_semantics=("parallel", "parallel", "arbitrary"),
            vmem_limit_bytes=48 * 1024 * 1024,
        ),
        cost_estimate=cost,
    )(x2d, weight, b2d)
    return out.reshape(*lead, N)


def _reference(x, weight, bias):
    y = jnp.einsum("...e,en->...n", x, weight, precision=lax.Precision.HIGHEST) + bias
    return 0.5 * y * (1.0 + lax.erf(y / jnp.sqrt(2.0)))


if __name__ == "__main__":
    key = jax.random.PRNGKey(0)
    k_x, k_w, k_b, k_x2, k_w2, k_b2 = jax.random.split(key, 6)

    # Small shapes implied by the module: (batch, seq, embed_dim) -> (batch, seq, out_dim)
    batch, seq, embed_dim, out_dim = 2, 8, 32, 64
    x = jax.random.normal(k_x, (batch, seq, embed_dim), dtype=jnp.float32)
    weight = jax.random.normal(k_w, (embed_dim, out_dim), dtype=jnp.float32) * 0.05
    bias = jax.random.normal(k_b, (out_dim,), dtype=jnp.float32) * 0.01

    y_ref = _reference(x, weight, bias)

    # 1) Default fast path: bf16 operands on the MXU, f32 accumulation, weight-resident.
    y = jax.block_until_ready(projection_block(x, weight, bias))
    assert y.shape == (batch, seq, out_dim)
    assert jnp.allclose(y, y_ref, atol=2e-2, rtol=2e-2), "bf16 path mismatch vs reference"

    # 2) Exact f32 compute path (same fast path, tight tolerance).
    y32 = jax.block_until_ready(projection_block(x, weight, bias, compute_dtype=jnp.float32))
    assert jnp.allclose(y32, y_ref, atol=1e-5, rtol=1e-5), "f32 path mismatch vs reference"

    # 3) General tiled path with ragged M/N/K tails (exercises in-kernel K-tail masking
    #    and Pallas-masked partial M/N edge blocks; resident path disabled on purpose).
    M2, E2, N2 = 300, 200, 200
    x2 = jax.random.normal(k_x2, (M2, E2), dtype=jnp.float32)
    w2 = jax.random.normal(k_w2, (E2, N2), dtype=jnp.float32) * 0.05
    b2 = jax.random.normal(k_b2, (N2,), dtype=jnp.float32) * 0.01
    y2 = jax.block_until_ready(
        projection_block(x2, w2, b2, tm=128, tn=128, tk=128,
                         compute_dtype=jnp.float32, weight_resident_bytes=0))
    assert jnp.allclose(y2, _reference(x2, w2, b2), atol=1e-4, rtol=1e-4), \
        "general tiled path mismatch vs reference"

    print("KERNEL_OK")
</pallas_src>

<mosaic_0001>
module attributes {stable_mosaic.version = 11 : i64} {
  func.func @_proj_gelu_resident_kernel(%arg0: i32, %arg1: memref<16x32xbf16, #tpu.memory_space<vmem>>, %arg2: memref<32x64xbf16, #tpu.memory_space<vmem>>, %arg3: memref<1x64xf32, #tpu.memory_space<vmem>>, %arg4: memref<16x64xf32, #tpu.memory_space<vmem>>) attributes {dimension_semantics = [#tpu.dimension_semantics<parallel>], iteration_bounds = array<i64: 1>, scalar_prefetch = 0 : i64, scratch_operands = 0 : i64, tpu.core_type = #tpu.core_type<tc>, window_params = [{transform_indices = @transform_0, window_bounds = array<i64: 16, 32>}, {pipeline_mode = #tpu.pipeline_mode<synchronous>, transform_indices = @transform_1, window_bounds = array<i64: 32, 64>}, {pipeline_mode = #tpu.pipeline_mode<synchronous>, transform_indices = @transform_2, window_bounds = array<i64: 1, 64>}, {transform_indices = @transform_3, window_bounds = array<i64: 16, 64>}]} {
    %c0 = arith.constant 0 : index
    %c0_0 = arith.constant 0 : index
    %0 = vector.load %arg1[%c0, %c0_0] : memref<16x32xbf16, #tpu.memory_space<vmem>>, vector<16x32xbf16>
    %c0_1 = arith.constant 0 : index
    %c0_2 = arith.constant 0 : index
    %1 = vector.load %arg2[%c0_1, %c0_2] : memref<32x64xbf16, #tpu.memory_space<vmem>>, vector<32x64xbf16>
    %cst = arith.constant dense<0.000000e+00> : vector<16x64xf32>
    %2 = tpu.matmul %0, %1, %cst {dimension_numbers = #tpu.dot_dimension_numbers<[1], [0], [0], [1], [0, 0, 1, 1], [], []>} : vector<16x32xbf16>, vector<32x64xbf16>, vector<16x64xf32> -> vector<16x64xf32>
    %c0_3 = arith.constant 0 : index
    %c0_4 = arith.constant 0 : index
    %3 = vector.load %arg3[%c0_3, %c0_4] : memref<1x64xf32, #tpu.memory_space<vmem>>, vector<1x64xf32>
    %4 = vector.broadcast %3 : vector<1x64xf32> to vector<16x64xf32>
    %5 = arith.addf %2, %4 : vector<16x64xf32>
    %cst_5 = arith.constant 5.000000e-01 : f32
    %6 = vector.broadcast %cst_5 : f32 to vector<16x64xf32>
    %7 = arith.mulf %6, %5 : vector<16x64xf32>
    %cst_6 = arith.constant 0.707106769 : f32
    %8 = vector.broadcast %cst_6 : f32 to vector<16x64xf32>
    %9 = arith.mulf %5, %8 : vector<16x64xf32>
    %10 = math.erf %9 : vector<16x64xf32>
    %cst_7 = arith.constant 1.000000e+00 : f32
    %11 = vector.broadcast %cst_7 : f32 to vector<16x64xf32>
    %12 = arith.addf %11, %10 : vector<16x64xf32>
    %13 = arith.mulf %7, %12 : vector<16x64xf32>
    %c0_8 = arith.constant 0 : index
    %c0_9 = arith.constant 0 : index
    %14 = vector.load %arg4[%c0_8, %c0_9] : memref<16x64xf32, #tpu.memory_space<vmem>>, vector<16x64xf32>
    tpu.vector_store %arg4[%c0_8, %c0_9], %13 {strides = array<i32>} : memref<16x64xf32, #tpu.memory_space<vmem>>, vector<16x64xf32>,
    return
  }
  func.func @transform_0(%arg0: i32) -> (i32, i32) {
    %c0_i32 = arith.constant 0 : i32
    %c0_i32_0 = arith.constant 0 : i32
    return %arg0, %c0_i32 : i32, i32
  }
  func.func @transform_1(%arg0: i32) -> (i32, i32) {
    %c0_i32 = arith.constant 0 : i32
    %c0_i32_0 = arith.constant 0 : i32
    %c0_i32_1 = arith.constant 0 : i32
    return %c0_i32, %c0_i32_0 : i32, i32
  }
  func.func @transform_2(%arg0: i32) -> (i32, i32) {
    %c0_i32 = arith.constant 0 : i32
    %c0_i32_0 = arith.constant 0 : i32
    %c0_i32_1 = arith.constant 0 : i32
    return %c0_i32, %c0_i32_0 : i32, i32
  }
  func.func @transform_3(%arg0: i32) -> (i32, i32) {
    %c0_i32 = arith.constant 0 : i32
    %c0_i32_0 = arith.constant 0 : i32
    return %arg0, %c0_i32 : i32, i32
  }
}

</mosaic_0001>

<llo_original>
// kernel: tpu_custom_call.1
$region0: #{tpu_custom_call.1}
  #allocation0 [shape = 'u32[]', space=smem, size = 0x4, offset = 0x4, fixed_abs, tag = 'smem constant byte address 0x4 - core index']
  #allocation1 [shape = 'u32[72,128]{1,0:T(1,128)}', space=vmem, size = 0x9000, scoped, tag = 'internal scratch']
  %s0 = inlined_call_operand.hbm [shape: bf16[16,32], index: 0, kind: input, shape index: {}]
  %s1 = inlined_call_operand.hbm [shape: bf16[32,64], index: 1, kind: input, shape index: {}]
  %s2 = inlined_call_operand.vmem [shape: f32[1,64], index: 2, kind: input, shape index: {}]
  %s3 = inlined_call_operand.hbm [shape: f32[16,64], index: 3, kind: output, shape index: {}]
  %s4 = sld [smem:[#allocation0]]
  $region30: #{tpu_custom_call.1} parent=0
    _
  %s6 = ssub.s32 1, %s4
  %s7 = scalar_select 0, %s6, %s4
  $region1: #{tpu_custom_call.1} parent=0
    #allocation2 [shape = 'u8[4096]{0}', space=vmem, size = 0x1000, scoped, tag = 'input window, operand 0, single buffered']
    #allocation3 [shape = 's32[1]{0}', space=sflag, size = 0x4, scoped, tag = 'scoped memory for tpu_custom_call.1']
    #allocation4 [shape = 's32[1]{0}', space=sflag, size = 0x4, scoped, tag = 'scoped memory for tpu_custom_call.1']
    #allocation5 [shape = 'u8[8192]{0}', space=vmem, size = 0x2000, scoped, tag = 'input window, operand 1, single buffered']
    #allocation6 [shape = 's32[1]{0}', space=sflag, size = 0x4, scoped, tag = 'scoped memory for tpu_custom_call.1']
    #allocation7 [shape = 'u8[8192]{0}', space=vmem, size = 0x2000, scoped, tag = 'output window, operand 0, single buffered']
    %8 = vsyncpa [#allocation3], 0
    %9 = vsyncpa [#allocation6], 0
    %10 = vsyncpa [#allocation4], 0
    // Predicated region
    $region2: #{tpu_custom_call.1} parent=1 // pred_check
      _
    $region3: #{tpu_custom_call.1} parent=1 // pred_check_branch
      %12 = sbr.rel (0) target = $region5
    $region4: #{tpu_custom_call.1} parent=1 // pred_region
      %14 = vsyncadd [#allocation3], 0
      %s15 = sshll.u32 %s0, 4
      %s16 = int_to_ptr.hbm [resolvable:$true] %s15
      %s17 = sshll.u32 [#allocation2], 4
      %s18 = int_to_ptr.vmem [resolvable:$true] %s17
      %23 = dma.hbm_to_vmem [thread:$0]  %s16, 128, %s18, [#allocation3], 64, 64, 4
    $region5: #{tpu_custom_call.1} parent=1 // pred_fallthru
      _
    // Predicated region
    $region6: #{tpu_custom_call.1} parent=1 // pred_check
      _
    $region7: #{tpu_custom_call.1} parent=1 // pred_check_branch
      %25 = sbr.rel (0) target = $region9
    $region8: #{tpu_custom_call.1} parent=1 // pred_region
      %27 = vsyncadd [#allocation6], 0
      %s28 = sshll.u32 %s1, 4
      %s29 = int_to_ptr.hbm [resolvable:$true] %s28
      %s30 = sshll.u32 [#allocation5], 4
      %s31 = int_to_ptr.vmem [resolvable:$true] %s30
      %36 = dma.hbm_to_vmem [thread:$0]  %s29, 256, %s31, [#allocation6], 64, 64, 4
    $region9: #{tpu_custom_call.1} parent=1 // pred_fallthru
      _
    // Predicated region
    $region10: #{tpu_custom_call.1} parent=1 // pred_check
      _
    $region11: #{tpu_custom_call.1} parent=1 // pred_check_branch
      %38 = sbr.rel (0) target = $region13
    $region12: #{tpu_custom_call.1} parent=1 // pred_region
      _
    $region13: #{tpu_custom_call.1} parent=1 // pred_fallthru
      _
    // Predicated region
    $region14: #{tpu_custom_call.1} parent=1 // pred_check
      _
    $region15: #{tpu_custom_call.1} parent=1 // pred_check_branch
      %40 = sbr.rel (0) target = $region17
    $region16: #{tpu_custom_call.1} parent=1 // pred_region
      %42 = dma.done [#allocation3], 128
    $region17: #{tpu_custom_call.1} parent=1 // pred_fallthru
      _
    // Predicated region
    $region18: #{tpu_custom_call.1} parent=1 // pred_check
      _
    $region19: #{tpu_custom_call.1} parent=1 // pred_check_branch
      %44 = sbr.rel (0) target = $region21
    $region20: #{tpu_custom_call.1} parent=1 // pred_region
      %46 = dma.done [#allocation6], 256
    $region21: #{tpu_custom_call.1} parent=1 // pred_fallthru
      _
    %v48 = vld [vmem:[#allocation2] sm:$0xf]
    %v49 = vld [vmem:[#allocation2 + $0x4] sm:$0xf]
    %v50 = vld [vmem:[#allocation5] sm:$0xf]
    %v51 = vld [vmem:[#allocation5 + $0x4] sm:$0xf]
    %v52 = vld [vmem:[#allocation5 + $0x8] sm:$0xf]
    %v53 = vld [vmem:[#allocation5 + $0xc] sm:$0xf]
    %v54 = vld [vmem:[%s2] sm:$0x1]
    %v56 = vperm.slane %v54, 0
    %v60 = vunpack.c.l.b16 %v48
    %v61 = vunpack.c.l.b16 %v49
    %v62 = vpack.c.b16 %v61, %v60
    %v67 = vunpack.c.l.b16 %v50
    %v68 = vunpack.c.l.b16 %v51
    %v69 = vunpack.c.l.b16 %v52
    %v70 = vunpack.c.l.b16 %v53
    %v71 = vpack.c.b16 %v68, %v67
    %v72 = vpack.c.b16 %v70, %v69
    %vm75 = vcmask 261120
    %v77 = vsel %vm75, %v62, 0
    %79 = vmatpush.bf16.msra.mxu0 0
    %80 = vmatpush.bf16.msra.mxu0 0
    %81 = vmatpush.bf16.msra.mxu0 0
    %82 = vmatpush.bf16.msra.mxu0 0
    %83 = vmatpush.bf16.msra.mxu0 0
    %84 = vmatpush.bf16.msra.mxu0 0
    %85 = vmatpush.bf16.msra.mxu0 %v72
    %86 = vmatpush.bf16.msra.mxu0 %v71
    %87 = vmatmul.bf16.gmra.mxu0 %v77
    %v88 = vpop.f32.mrf.mxu0
    %v89 = vadd.f32 %v56, %v88
    %v90 = vpop.f32.mrf.mxu0
    %v91 = vadd.f32 %v56, %v90
    %92 = vdwg.mxu0
    %v93 = vmul.f32 %v89, 0.5
    %v94 = vmul.f32 %v91, 0.5
    %v95 = vmul.f32 %v89, 0.70710677
    %v96 = vmul.f32 %v91, 0.70710677
    %v97 = vmul.f32 %v95, %v95
    %v98 = vmin.f32 16.0, %v97
    %v99 = vmul.f32 %v98, 2.1237322e-06
    %v100 = vadd.f32 %v99, 0.00028619796
    %v101 = vmul.f32 %v98, %v100
    %v102 = vadd.f32 %v101, 0.0036580483
    %v103 = vmul.f32 %v98, %v102
    %v104 = vadd.f32 %v103, 0.05243302
    %v105 = vmul.f32 %v98, %v104
    %v106 = vadd.f32 %v105, 0.18741608
    %v107 = vmul.f32 %v98, %v106
    %v108 = vadd.f32 %v107, 1.1283791
    %v109 = vmul.f32 %v95, %v108
    %v110 = vmul.f32 %v98, 3.8918573e-05
    %v111 = vadd.f32 %v110, 0.001143296
    %v112 = vmul.f32 %v98, %v111
    %v113 = vadd.f32 %v112, 0.014752088
    %v114 = vmul.f32 %v98, %v113
    %v115 = vadd.f32 %v114, 0.112945676
    %v116 = vmul.f32 %v98, %v115
    %v117 = vadd.f32 %v116, 0.4994258
    %v118 = vmul.f32 %v98, %v117
    %v119 = vadd.f32 %v118, 1.0
    %v120 = vrcp.pop %v119
    %v121 = vmul.f32 %v119, %v120
    %v122 = vsub.f32 1.0, %v121
    %v123 = vmul.f32 %v120, %v122
    %v124 = vadd.f32 %v120, %v123
    %vm125 = vweird.f32 %v119
    %vm126 = vweird.f32 %v120
    %vm127 = vmor %vm125, %vm126
    %v128 = vsel %vm127, %v120, %v124
    %v129 = vand.u32 2147483647, %v119
    %vm130 = vcmp.eq.f32.partialorder %v129, 8.507059e+37
    %v131 = vand.u32 %v119, 2147483648
    %v132 = vor.u32 1.1754944e-38, %v131
    %v133 = vsel %vm130, %v132, %v128
    %v134 = vmul.f32 %v109, %v133
    %v135 = vmin.f32 %v134, 1.0
    %v136 = vmax.f32 %v135, -1.0
    %v137 = vmul.f32 %v96, %v96
    %v138 = vmin.f32 16.0, %v137
    %v139 = vmul.f32 %v138, 2.1237322e-06
    %v140 = vadd.f32 %v139, 0.00028619796
    %v141 = vmul.f32 %v138, %v140
    %v142 = vadd.f32 %v141, 0.0036580483
    %v143 = vmul.f32 %v138, %v142
    %v144 = vadd.f32 %v143, 0.05243302
    %v145 = vmul.f32 %v138, %v144
    %v146 = vadd.f32 %v145, 0.18741608
    %v147 = vmul.f32 %v138, %v146
    %v148 = vadd.f32 %v147, 1.1283791
    %v149 = vmul.f32 %v96, %v148
    %v150 = vmul.f32 %v138, 3.8918573e-05
    %v151 = vadd.f32 %v150, 0.001143296
    %v152 = vmul.f32 %v138, %v151
    %v153 = vadd.f32 %v152, 0.014752088
    %v154 = vmul.f32 %v138, %v153
    %v155 = vadd.f32 %v154, 0.112945676
    %v156 = vmul.f32 %v138, %v155
    %v157 = vadd.f32 %v156, 0.4994258
    %v158 = vmul.f32 %v138, %v157
    %v159 = vadd.f32 %v158, 1.0
    %v160 = vrcp.pop %v159
    %v161 = vmul.f32 %v159, %v160
    %v162 = vsub.f32 1.0, %v161
    %v163 = vmul.f32 %v160, %v162
    %v164 = vadd.f32 %v160, %v163
    %vm165 = vweird.f32 %v159
    %vm166 = vweird.f32 %v160
    %vm167 = vmor %vm165, %vm166
    %v168 = vsel %vm167, %v160, %v164
    %v169 = vand.u32 2147483647, %v159
    %vm170 = vcmp.eq.f32.partialorder %v169, 8.507059e+37
    %v171 = vand.u32 %v159, 2147483648
    %v172 = vor.u32 1.1754944e-38, %v171
    %v173 = vsel %vm170, %v172, %v168
    %v174 = vmul.f32 %v149, %v173
    %v175 = vmin.f32 %v174, 1.0
    %v176 = vmax.f32 %v175, -1.0
    %v177 = vadd.f32 %v136, 1.0
    %v178 = vadd.f32 %v176, 1.0
    %v179 = vmul.f32 %v93, %v177
    %v180 = vmul.f32 %v94, %v178
    %vm181 = vcmask 523264
    %182 = vst.msk [vmem:[#allocation7] sm:$0xff] %vm181, %v179
    %183 = vst.msk [vmem:[#allocation7 + $0x8] sm:$0xff] %vm181, %v180
    // Predicated region
    $region22: #{tpu_custom_call.1} parent=1 // pred_check
      _
    $region23: #{tpu_custom_call.1} parent=1 // pred_check_branch
      %185 = sbr.rel (0) target = $region25
    $region24: #{tpu_custom_call.1} parent=1 // pred_region
      %187 = vsyncadd [#allocation4], 0
      %s188 = sshll.u32 [#allocation7], 4
      %s189 = int_to_ptr.vmem [resolvable:$true] %s188
      %s190 = sshll.u32 %s3, 4
      %s191 = int_to_ptr.hbm [resolvable:$true] %s190
      %196 = dma.vmem_to_hbm [thread:$0]  %s189, 256, %s191, [#allocation4], 128, 128, 8
    $region25: #{tpu_custom_call.1} parent=1 // pred_fallthru
      _
    // Predicated region
    $region26: #{tpu_custom_call.1} parent=1 // pred_check
      _
    $region27: #{tpu_custom_call.1} parent=1 // pred_check_branch
      %198 = sbr.rel (0) target = $region29
    $region28: #{tpu_custom_call.1} parent=1 // pred_region
      %200 = dma.done [#allocation4], 256
    $region29: #{tpu_custom_call.1} parent=1 // pred_fallthru
      _
    %201 = vsyncpa [#allocation3], 1
    %202 = vsyncpa [#allocation6], 1
    %203 = vsyncpa [#allocation4], 1

</llo_original>
